<compile_context>
chip_gen: v6e
topology: v6e:2x2x1
jax: 0.10.0
libtpu: 0.0.40
codegen_flags: <defaults>
</compile_context>

<pallas_src>
import functools

import numpy as np

import jax
import jax.numpy as jnp
from jax.experimental import pallas as pl
from jax.experimental.pallas import tpu as pltpu

_TARGET_LANES = 4096  # aim for a few thousand lanes of matmul output per step


def _round_up(x, m):
    return (x + m - 1) // m * m


# ----------------------------------------------------------------------------
# Host-side helpers (constants / weight packing).
# ----------------------------------------------------------------------------
def _make_tap_masks(K, H, W, TB):
    """(K*K, TB*H*W) f32 validity masks for 'same' padding, tiled TB times.

    Built with numpy so they are baked in as compile-time constants."""
    HW = H * W
    L = TB * HW
    p = K // 2
    pos = np.arange(L, dtype=np.int64)
    q = pos % HW                 # within-image flat position h*W + w
    ww = q % W                   # within-image column w
    rows = []
    for dy in range(K):
        for dx in range(K):
            oh, ow = dy - p, dx - p
            row_lo = max(0, -oh) * W          # h + oh >= 0
            row_hi = min(H, H - oh) * W       # h + oh <  H
            col_lo = max(0, -ow)              # w + ow >= 0
            col_hi = min(W, W - ow)           # w + ow <  W
            rows.append((q >= row_lo) & (q < row_hi) &
                        (ww >= col_lo) & (ww < col_hi))
    return jnp.asarray(np.stack(rows).astype(np.float32))


def _pack_w(w, cmax):
    """torch (Cout, Cin, K, K) -> (Cmax, K*K*Cmax) bf16; column order
    (dy*K + dx)*Cmax + cin, matching the in-kernel patch rows."""
    cout, cin, k, _ = w.shape
    wp = jnp.zeros((cmax, k, k, cmax), jnp.float32)
    wp = wp.at[:cout, :, :, :cin].set(jnp.transpose(w, (0, 2, 3, 1)))
    return wp.reshape(cmax, k * k * cmax).astype(jnp.bfloat16)


def _pack_w_single_in(w, cmax):
    """torch (Cout, 1, K, K) -> (Cmax, K*K) bf16 (first layer / conv_single)."""
    cout, cin, k, _ = w.shape
    assert cin == 1
    wp = jnp.zeros((cmax, k * k), jnp.float32)
    wp = wp.at[:cout].set(w.reshape(cout, k * k))
    return wp.astype(jnp.bfloat16)


def _pack_b(b, cmax):
    bp = jnp.zeros((cmax, 1), jnp.float32)
    return bp.at[:b.shape[0], 0].set(b)


# ----------------------------------------------------------------------------
# In-kernel building blocks.
# ----------------------------------------------------------------------------
def _build_patch(act, masks, shifts, L):
    """im2col via lane rolls (XLU slot) + precomputed boundary masks.

    act:   (C, L) f32, spatial (TB images concatenated) on lanes
    masks: (K*K, L) f32 {0,1}
    Returns (K*K*C, L) f32 patch.  Masked-out positions (image borders and any
    cross-image / wrap-around roll leakage) are exactly zero."""
    cols = []
    for t, s in enumerate(shifts):
        shifted = act if s == 0 else pltpu.roll(act, shift=(-s) % L, axis=1)
        cols.append(shifted * masks[t:t + 1, :])
    # TODO(synk): on v6e, if the extended-issue slot saturates after batching,
    # stage the patch into VMEM scratch / overlap taps of layer i+1 with the
    # matmul of layer i to decouple rolls from vmatmul pushes.
    return jnp.concatenate(cols, axis=0)


def _conv_from_patch(patch, wmat, bias, activation):
    """MXU matmul (bf16 operands, f32 accumulate) + fused bias + activation."""
    out = jnp.dot(wmat, patch.astype(jnp.bfloat16),
                  preferred_element_type=jnp.float32)
    out = out + bias                       # (Cmax, 1) broadcast along lanes
    if activation == "relu":
        out = jnp.maximum(out, 0.0)
    elif activation == "tanh":
        out = jnp.tanh(out)
    return out


# ----------------------------------------------------------------------------
# Kernels.
# ----------------------------------------------------------------------------
def _fused_net_kernel(x_ref, mask_ref, wi_ref, bi_ref, wm_ref, bm_ref,
                      wl_ref, bl_ref, o_ref, *, K, W, L, Cmax, n_mid, last_act):
    p = K // 2
    shifts = [(dy - p) * W + (dx - p) for dy in range(K) for dx in range(K)]
    masks = mask_ref[...]                               # (K*K, L) constants

    # convi + ReLU, specialized to the single real input channel.
    x = x_ref[0].astype(jnp.float32)                    # (1, L)
    patch = _build_patch(x, masks, shifts, L)           # (K*K, L)
    act = _conv_from_patch(patch, wi_ref[...], bi_ref[...], "relu")  # (Cmax, L)

    # (layer_count - 2) identical middle layers; weights stay VMEM-resident.
    if n_mid > 0:
        wm = wm_ref[...]
        bm = bm_ref[...]

        def mid(a):
            return _conv_from_patch(_build_patch(a, masks, shifts, L),
                                    wm, bm, "relu")

        if n_mid <= 16:
            for _ in range(n_mid):                      # static -> fully unrolled
                act = mid(act)
        else:
            act = jax.lax.fori_loop(0, n_mid, lambda i, a: mid(a), act,
                                    unroll=4)

    # convl (+ optional tanh); store padded channels, slice in the wrapper.
    out = _conv_from_patch(_build_patch(act, masks, shifts, L),
                           wl_ref[...], bl_ref[...],
                           "tanh" if last_act else None)
    o_ref[...] = out.reshape(1, Cmax, L).astype(o_ref.dtype)


def _single_conv_kernel(x_ref, mask_ref, w_ref, b_ref, o_ref, *, K, W, L, Cmax):
    # layer_count == 1 path: conv_single (1 -> 3), no activation.
    p = K // 2
    shifts = [(dy - p) * W + (dx - p) for dy in range(K) for dx in range(K)]
    masks = mask_ref[...]
    x = x_ref[0].astype(jnp.float32)
    out = _conv_from_patch(_build_patch(x, masks, shifts, L),
                           w_ref[...], b_ref[...], None)
    o_ref[...] = out.reshape(1, Cmax, L).astype(o_ref.dtype)


# ----------------------------------------------------------------------------
# Forward pass, mirroring ImprovedNet.forward exactly (batch_norm=False).
# ----------------------------------------------------------------------------
# TODO(synk): batch_norm=True path (training-mode BatchNorm2d with batch stats)
# is not implemented; this matches the module's default batch_norm=False.
def improved_net_forward(x_nchw, params, layer_count, last_layer_activation=False):
    N, Cin, H, W = x_nchw.shape
    assert Cin == 1, "ImprovedNet takes a grayscale (1-channel) input"
    assert layer_count >= 1
    K = params["convi_w"].shape[-1]
    assert K % 2 == 1, "padding=K//2 matches 'same' only for odd kernel sizes"
    kern_count = params["convi_w"].shape[0]
    HW = H * W
    Cout = 3
    Cmax = _round_up(max(kern_count, Cout), 8)   # sublane-friendly channel pad

    # TB images per grid step, stacked on the lane axis.  Keep >= 2 grid blocks
    # when N >= 2 so v7x's two TensorCores both get work ("parallel" semantics).
    TB = max(1, min(N, _TARGET_LANES // max(HW, 1)))
    if N >= 2:
        TB = min(TB, -(-N // 2))
    nblocks = -(-N // TB)
    Npad = nblocks * TB
    L = TB * HW

    # NCHW consumed as flat (nblocks, 1, TB*HW): spatial axis is lane-dense,
    # TB images contiguous per block; pad the batch to a multiple of TB.
    x2 = x_nchw.reshape(N, HW)
    if Npad > N:
        x2 = jnp.concatenate([x2, jnp.zeros((Npad - N, HW), x2.dtype)], axis=0)
    x2 = x2.reshape(nblocks, 1, L)

    masks = _make_tap_masks(K, H, W, TB)          # (K*K, L) f32 constants

    # TODO(synk): for large H*W add spatial (row) tiling with a K-1 halo and an
    # explicit vmem_limit_bytes budget (v7x has only 64 MiB physical VMEM);
    # whole-image lane blocks are fine at these sizes.
    cparams = pltpu.CompilerParams(dimension_semantics=("parallel",))
    out_shape = jax.ShapeDtypeStruct((nblocks, Cmax, L), jnp.float32)
    x_spec = pl.BlockSpec((1, 1, L), lambda n: (n, 0, 0))
    o_spec = pl.BlockSpec((1, Cmax, L), lambda n: (n, 0, 0))
    rep2d = lambda n: (0, 0)   # masks/weights/biases: same full block each step

    if layer_count == 1:
        w = _pack_w_single_in(params["conv_single_w"], Cmax)
        b = _pack_b(params["conv_single_b"], Cmax)
        kernel = functools.partial(_single_conv_kernel, K=K, W=W, L=L, Cmax=Cmax)
        out = pl.pallas_call(
            kernel, out_shape=out_shape, grid=(nblocks,),
            in_specs=[x_spec,
                      pl.BlockSpec(masks.shape, rep2d),
                      pl.BlockSpec(w.shape, rep2d),
                      pl.BlockSpec(b.shape, rep2d)],
            out_specs=o_spec, compiler_params=cparams,
        )(x2, masks, w, b)
    else:
        wi = _pack_w_single_in(params["convi_w"], Cmax)
        bi = _pack_b(params["convi_b"], Cmax)
        wm = _pack_w(params["convm_w"], Cmax)
        bm = _pack_b(params["convm_b"], Cmax)
        wl = _pack_w(params["convl_w"], Cmax)
        bl = _pack_b(params["convl_b"], Cmax)
        kernel = functools.partial(_fused_net_kernel, K=K, W=W, L=L, Cmax=Cmax,
                                   n_mid=layer_count - 2,
                                   last_act=last_layer_activation)
        out = pl.pallas_call(
            kernel, out_shape=out_shape, grid=(nblocks,),
            in_specs=[x_spec,
                      pl.BlockSpec(masks.shape, rep2d),
                      pl.BlockSpec(wi.shape, rep2d), pl.BlockSpec(bi.shape, rep2d),
                      pl.BlockSpec(wm.shape, rep2d), pl.BlockSpec(bm.shape, rep2d),
                      pl.BlockSpec(wl.shape, rep2d), pl.BlockSpec(bl.shape, rep2d)],
            out_specs=o_spec, compiler_params=cparams,
        )(x2, masks, wi, bi, wm, bm, wl, bl)

    # Padded channels / padded batch are sliced off here (cheap XLA ops); the
    # kernel itself only emits lane-dense, sublane-aligned stores.
    out = out.reshape(nblocks, Cmax, TB, HW).transpose(0, 2, 1, 3)
    out = out.reshape(Npad, Cmax, HW)[:N, :Cout]
    return out.reshape(N, Cout, H, W)


# ----------------------------------------------------------------------------
# Parameters (deterministic, PyTorch-style uniform +-1/sqrt(fan_in), torch layout).
# ----------------------------------------------------------------------------
def make_params(key, kern_size, kern_count):
    def conv_init(k, cin, cout, ks):
        kw, kb = jax.random.split(k)
        bound = 1.0 / (cin * ks * ks) ** 0.5
        w = jax.random.uniform(kw, (cout, cin, ks, ks), jnp.float32, -bound, bound)
        b = jax.random.uniform(kb, (cout,), jnp.float32, -bound, bound)
        return w, b

    k1, k2, k3, k4 = jax.random.split(key, 4)
    p = {}
    p["convi_w"], p["convi_b"] = conv_init(k1, 1, kern_count, kern_size)
    p["convm_w"], p["convm_b"] = conv_init(k2, kern_count, kern_count, kern_size)
    p["convl_w"], p["convl_b"] = conv_init(k3, kern_count, 3, kern_size)
    p["conv_single_w"], p["conv_single_b"] = conv_init(k4, 1, 3, kern_size)
    return p


# Pure-JAX reference (same math, XLA conv) used only for a correctness check.
def _reference_forward(x, params, layer_count, last_layer_activation):
    K = params["convi_w"].shape[-1]
    p = K // 2

    def conv(y, w, b):
        y = jax.lax.conv_general_dilated(
            y, w, window_strides=(1, 1), padding=[(p, p), (p, p)],
            dimension_numbers=("NCHW", "OIHW", "NCHW"),
            precision=jax.lax.Precision.HIGHEST)
        return y + b[None, :, None, None]

    if layer_count == 1:
        return conv(x, params["conv_single_w"], params["conv_single_b"])
    y = jax.nn.relu(conv(x, params["convi_w"], params["convi_b"]))
    for _ in range(layer_count - 2):
        y = jax.nn.relu(conv(y, params["convm_w"], params["convm_b"]))
    y = conv(y, params["convl_w"], params["convl_b"])
    if last_layer_activation:
        y = jnp.tanh(y)
    return y


if __name__ == "__main__":
    layer_count = 3
    kern_size = 3
    kern_count = 4
    last_layer_activation = True

    key = jax.random.PRNGKey(0)
    kx, kp = jax.random.split(key)

    x = jax.random.normal(kx, (2, 1, 16, 16), jnp.float32)   # (N, C=1, H, W)
    params = make_params(kp, kern_size, kern_count)

    fwd = jax.jit(functools.partial(
        improved_net_forward,
        layer_count=layer_count,
        last_layer_activation=last_layer_activation))

    out = fwd(x, params)
    jax.block_until_ready(out)

    assert out.shape == (2, 3, 16, 16), out.shape
    assert out.dtype == jnp.float32

    ref = _reference_forward(x, params, layer_count, last_layer_activation)
    max_err = float(jnp.max(jnp.abs(out - ref)))
    # bf16 MXU operands with f32 accumulation vs an f32-HIGHEST reference.
    assert max_err < 3e-2, f"mismatch vs reference: max abs err = {max_err}"

    print("KERNEL_OK")
</pallas_src>

<mosaic_0001>
module attributes {stable_mosaic.version = 11 : i64} {
  func.func @_fused_net_kernel(%arg0: i32, %arg1: memref<1x1x256xf32, #tpu.memory_space<vmem>>, %arg2: memref<9x256xf32, #tpu.memory_space<vmem>>, %arg3: memref<8x9xbf16, #tpu.memory_space<vmem>>, %arg4: memref<8x1xf32, #tpu.memory_space<vmem>>, %arg5: memref<8x72xbf16, #tpu.memory_space<vmem>>, %arg6: memref<8x1xf32, #tpu.memory_space<vmem>>, %arg7: memref<8x72xbf16, #tpu.memory_space<vmem>>, %arg8: memref<8x1xf32, #tpu.memory_space<vmem>>, %arg9: memref<1x8x256xf32, #tpu.memory_space<vmem>>) attributes {dimension_semantics = [#tpu.dimension_semantics<parallel>], iteration_bounds = array<i64: 2>, scalar_prefetch = 0 : i64, scratch_operands = 0 : i64, tpu.core_type = #tpu.core_type<tc>, window_params = [{transform_indices = @transform_0, window_bounds = array<i64: 1, 1, 256>}, {pipeline_mode = #tpu.pipeline_mode<synchronous>, transform_indices = @transform_1, window_bounds = array<i64: 9, 256>}, {pipeline_mode = #tpu.pipeline_mode<synchronous>, transform_indices = @transform_2, window_bounds = array<i64: 8, 9>}, {pipeline_mode = #tpu.pipeline_mode<synchronous>, transform_indices = @transform_3, window_bounds = array<i64: 8, 1>}, {pipeline_mode = #tpu.pipeline_mode<synchronous>, transform_indices = @transform_4, window_bounds = array<i64: 8, 72>}, {pipeline_mode = #tpu.pipeline_mode<synchronous>, transform_indices = @transform_5, window_bounds = array<i64: 8, 1>}, {pipeline_mode = #tpu.pipeline_mode<synchronous>, transform_indices = @transform_6, window_bounds = array<i64: 8, 72>}, {pipeline_mode = #tpu.pipeline_mode<synchronous>, transform_indices = @transform_7, window_bounds = array<i64: 8, 1>}, {transform_indices = @transform_8, window_bounds = array<i64: 1, 8, 256>}]} {
    %c0 = arith.constant 0 : index
    %c0_0 = arith.constant 0 : index
    %0 = vector.load %arg2[%c0, %c0_0] : memref<9x256xf32, #tpu.memory_space<vmem>>, vector<9x256xf32>
    %c0_1 = arith.constant 0 : index
    %c0_2 = arith.constant 0 : index
    %c0_3 = arith.constant 0 : index
    %1 = vector.load %arg1[%c0_1, %c0_2, %c0_3] : memref<1x1x256xf32, #tpu.memory_space<vmem>>, vector<1x1x256xf32>
    %2 = vector.shape_cast %1 : vector<1x1x256xf32> to vector<1x256xf32>
    %c17_i32 = arith.constant 17 : i32
    %3 = tpu.dynamic_rotate %2 by %c17_i32 dim 1 : vector<1x256xf32>, i32 -> vector<1x256xf32>
    %4 = vector.extract_strided_slice %0 {offsets = [0, 0], sizes = [1, 256], strides = [1, 1]} : vector<9x256xf32> to vector<1x256xf32>
    %5 = arith.mulf %3, %4 : vector<1x256xf32>
    %c16_i32 = arith.constant 16 : i32
    %6 = tpu.dynamic_rotate %2 by %c16_i32 dim 1 : vector<1x256xf32>, i32 -> vector<1x256xf32>
    %7 = vector.extract_strided_slice %0 {offsets = [1, 0], sizes = [1, 256], strides = [1, 1]} : vector<9x256xf32> to vector<1x256xf32>
    %8 = arith.mulf %6, %7 : vector<1x256xf32>
    %c15_i32 = arith.constant 15 : i32
    %9 = tpu.dynamic_rotate %2 by %c15_i32 dim 1 : vector<1x256xf32>, i32 -> vector<1x256xf32>
    %10 = vector.extract_strided_slice %0 {offsets = [2, 0], sizes = [1, 256], strides = [1, 1]} : vector<9x256xf32> to vector<1x256xf32>
    %11 = arith.mulf %9, %10 : vector<1x256xf32>
    %c1_i32 = arith.constant 1 : i32
    %12 = tpu.dynamic_rotate %2 by %c1_i32 dim 1 : vector<1x256xf32>, i32 -> vector<1x256xf32>
    %13 = vector.extract_strided_slice %0 {offsets = [3, 0], sizes = [1, 256], strides = [1, 1]} : vector<9x256xf32> to vector<1x256xf32>
    %14 = arith.mulf %12, %13 : vector<1x256xf32>
    %15 = vector.extract_strided_slice %0 {offsets = [4, 0], sizes = [1, 256], strides = [1, 1]} : vector<9x256xf32> to vector<1x256xf32>
    %16 = arith.mulf %2, %15 : vector<1x256xf32>
    %c255_i32 = arith.constant 255 : i32
    %17 = tpu.dynamic_rotate %2 by %c255_i32 dim 1 : vector<1x256xf32>, i32 -> vector<1x256xf32>
    %18 = vector.extract_strided_slice %0 {offsets = [5, 0], sizes = [1, 256], strides = [1, 1]} : vector<9x256xf32> to vector<1x256xf32>
    %19 = arith.mulf %17, %18 : vector<1x256xf32>
    %c241_i32 = arith.constant 241 : i32
    %20 = tpu.dynamic_rotate %2 by %c241_i32 dim 1 : vector<1x256xf32>, i32 -> vector<1x256xf32>
    %21 = vector.extract_strided_slice %0 {offsets = [6, 0], sizes = [1, 256], strides = [1, 1]} : vector<9x256xf32> to vector<1x256xf32>
    %22 = arith.mulf %20, %21 : vector<1x256xf32>
    %c240_i32 = arith.constant 240 : i32
    %23 = tpu.dynamic_rotate %2 by %c240_i32 dim 1 : vector<1x256xf32>, i32 -> vector<1x256xf32>
    %24 = vector.extract_strided_slice %0 {offsets = [7, 0], sizes = [1, 256], strides = [1, 1]} : vector<9x256xf32> to vector<1x256xf32>
    %25 = arith.mulf %23, %24 : vector<1x256xf32>
    %c239_i32 = arith.constant 239 : i32
    %26 = tpu.dynamic_rotate %2 by %c239_i32 dim 1 : vector<1x256xf32>, i32 -> vector<1x256xf32>
    %27 = vector.extract_strided_slice %0 {offsets = [8, 0], sizes = [1, 256], strides = [1, 1]} : vector<9x256xf32> to vector<1x256xf32>
    %28 = arith.mulf %26, %27 : vector<1x256xf32>
    %29 = tpu.concatenate %5, %8, %11, %14, %16, %19, %22, %25, %28 in 0 : vector<1x256xf32>, vector<1x256xf32>, vector<1x256xf32>, vector<1x256xf32>, vector<1x256xf32>, vector<1x256xf32>, vector<1x256xf32>, vector<1x256xf32>, vector<1x256xf32> -> vector<9x256xf32>
    %c0_4 = arith.constant 0 : index
    %c0_5 = arith.constant 0 : index
    %30 = vector.load %arg3[%c0_4, %c0_5] : memref<8x9xbf16, #tpu.memory_space<vmem>>, vector<8x9xbf16>
    %c0_6 = arith.constant 0 : index
    %c0_7 = arith.constant 0 : index
    %31 = vector.load %arg4[%c0_6, %c0_7] : memref<8x1xf32, #tpu.memory_space<vmem>>, vector<8x1xf32>
    %32 = arith.truncf %29 : vector<9x256xf32> to vector<9x256xbf16>
    %cst = arith.constant dense<0.000000e+00> : vector<8x256xf32>
    %33 = tpu.matmul %30, %32, %cst {dimension_numbers = #tpu.dot_dimension_numbers<[1], [0], [0], [1], [0, 0, 1, 1], [], []>} : vector<8x9xbf16>, vector<9x256xbf16>, vector<8x256xf32> -> vector<8x256xf32>
    %34 = vector.broadcast %31 : vector<8x1xf32> to vector<8x256xf32>
    %35 = arith.addf %33, %34 : vector<8x256xf32>
    %cst_8 = arith.constant 0.000000e+00 : f32
    %36 = vector.broadcast %cst_8 : f32 to vector<8x256xf32>
    %37 = arith.maximumf %35, %36 : vector<8x256xf32>
    %c0_9 = arith.constant 0 : index
    %c0_10 = arith.constant 0 : index
    %38 = vector.load %arg5[%c0_9, %c0_10] : memref<8x72xbf16, #tpu.memory_space<vmem>>, vector<8x72xbf16>
    %c0_11 = arith.constant 0 : index
    %c0_12 = arith.constant 0 : index
    %39 = vector.load %arg6[%c0_11, %c0_12] : memref<8x1xf32, #tpu.memory_space<vmem>>, vector<8x1xf32>
    %c17_i32_13 = arith.constant 17 : i32
    %40 = tpu.dynamic_rotate %37 by %c17_i32_13 dim 1 : vector<8x256xf32>, i32 -> vector<8x256xf32>
    %41 = vector.extract_strided_slice %0 {offsets = [0, 0], sizes = [1, 256], strides = [1, 1]} : vector<9x256xf32> to vector<1x256xf32>
    %42 = vector.broadcast %41 : vector<1x256xf32> to vector<8x256xf32>
    %43 = arith.mulf %40, %42 : vector<8x256xf32>
    %c16_i32_14 = arith.constant 16 : i32
    %44 = tpu.dynamic_rotate %37 by %c16_i32_14 dim 1 : vector<8x256xf32>, i32 -> vector<8x256xf32>
    %45 = vector.extract_strided_slice %0 {offsets = [1, 0], sizes = [1, 256], strides = [1, 1]} : vector<9x256xf32> to vector<1x256xf32>
    %46 = vector.broadcast %45 : vector<1x256xf32> to vector<8x256xf32>
    %47 = arith.mulf %44, %46 : vector<8x256xf32>
    %c15_i32_15 = arith.constant 15 : i32
    %48 = tpu.dynamic_rotate %37 by %c15_i32_15 dim 1 : vector<8x256xf32>, i32 -> vector<8x256xf32>
    %49 = vector.extract_strided_slice %0 {offsets = [2, 0], sizes = [1, 256], strides = [1, 1]} : vector<9x256xf32> to vector<1x256xf32>
    %50 = vector.broadcast %49 : vector<1x256xf32> to vector<8x256xf32>
    %51 = arith.mulf %48, %50 : vector<8x256xf32>
    %c1_i32_16 = arith.constant 1 : i32
    %52 = tpu.dynamic_rotate %37 by %c1_i32_16 dim 1 : vector<8x256xf32>, i32 -> vector<8x256xf32>
    %53 = vector.extract_strided_slice %0 {offsets = [3, 0], sizes = [1, 256], strides = [1, 1]} : vector<9x256xf32> to vector<1x256xf32>
    %54 = vector.broadcast %53 : vector<1x256xf32> to vector<8x256xf32>
    %55 = arith.mulf %52, %54 : vector<8x256xf32>
    %56 = vector.extract_strided_slice %0 {offsets = [4, 0], sizes = [1, 256], strides = [1, 1]} : vector<9x256xf32> to vector<1x256xf32>
    %57 = vector.broadcast %56 : vector<1x256xf32> to vector<8x256xf32>
    %58 = arith.mulf %37, %57 : vector<8x256xf32>
    %c255_i32_17 = arith.constant 255 : i32
    %59 = tpu.dynamic_rotate %37 by %c255_i32_17 dim 1 : vector<8x256xf32>, i32 -> vector<8x256xf32>
    %60 = vector.extract_strided_slice %0 {offsets = [5, 0], sizes = [1, 256], strides = [1, 1]} : vector<9x256xf32> to vector<1x256xf32>
    %61 = vector.broadcast %60 : vector<1x256xf32> to vector<8x256xf32>
    %62 = arith.mulf %59, %61 : vector<8x256xf32>
    %c241_i32_18 = arith.constant 241 : i32
    %63 = tpu.dynamic_rotate %37 by %c241_i32_18 dim 1 : vector<8x256xf32>, i32 -> vector<8x256xf32>
    %64 = vector.extract_strided_slice %0 {offsets = [6, 0], sizes = [1, 256], strides = [1, 1]} : vector<9x256xf32> to vector<1x256xf32>
    %65 = vector.broadcast %64 : vector<1x256xf32> to vector<8x256xf32>
    %66 = arith.mulf %63, %65 : vector<8x256xf32>
    %c240_i32_19 = arith.constant 240 : i32
    %67 = tpu.dynamic_rotate %37 by %c240_i32_19 dim 1 : vector<8x256xf32>, i32 -> vector<8x256xf32>
    %68 = vector.extract_strided_slice %0 {offsets = [7, 0], sizes = [1, 256], strides = [1, 1]} : vector<9x256xf32> to vector<1x256xf32>
    %69 = vector.broadcast %68 : vector<1x256xf32> to vector<8x256xf32>
    %70 = arith.mulf %67, %69 : vector<8x256xf32>
    %c239_i32_20 = arith.constant 239 : i32
    %71 = tpu.dynamic_rotate %37 by %c239_i32_20 dim 1 : vector<8x256xf32>, i32 -> vector<8x256xf32>
    %72 = vector.extract_strided_slice %0 {offsets = [8, 0], sizes = [1, 256], strides = [1, 1]} : vector<9x256xf32> to vector<1x256xf32>
    %73 = vector.broadcast %72 : vector<1x256xf32> to vector<8x256xf32>
    %74 = arith.mulf %71, %73 : vector<8x256xf32>
    %75 = tpu.concatenate %43, %47, %51, %55, %58, %62, %66, %70, %74 in 0 : vector<8x256xf32>, vector<8x256xf32>, vector<8x256xf32>, vector<8x256xf32>, vector<8x256xf32>, vector<8x256xf32>, vector<8x256xf32>, vector<8x256xf32>, vector<8x256xf32> -> vector<72x256xf32>
    %76 = arith.truncf %75 : vector<72x256xf32> to vector<72x256xbf16>
    %cst_21 = arith.constant dense<0.000000e+00> : vector<8x256xf32>
    %77 = tpu.matmul %38, %76, %cst_21 {dimension_numbers = #tpu.dot_dimension_numbers<[1], [0], [0], [1], [0, 0, 1, 1], [], []>} : vector<8x72xbf16>, vector<72x256xbf16>, vector<8x256xf32> -> vector<8x256xf32>
    %78 = vector.broadcast %39 : vector<8x1xf32> to vector<8x256xf32>
    %79 = arith.addf %77, %78 : vector<8x256xf32>
    %cst_22 = arith.constant 0.000000e+00 : f32
    %80 = vector.broadcast %cst_22 : f32 to vector<8x256xf32>
    %81 = arith.maximumf %79, %80 : vector<8x256xf32>
    %c17_i32_23 = arith.constant 17 : i32
    %82 = tpu.dynamic_rotate %81 by %c17_i32_23 dim 1 : vector<8x256xf32>, i32 -> vector<8x256xf32>
    %83 = vector.extract_strided_slice %0 {offsets = [0, 0], sizes = [1, 256], strides = [1, 1]} : vector<9x256xf32> to vector<1x256xf32>
    %84 = vector.broadcast %83 : vector<1x256xf32> to vector<8x256xf32>
    %85 = arith.mulf %82, %84 : vector<8x256xf32>
    %c16_i32_24 = arith.constant 16 : i32
    %86 = tpu.dynamic_rotate %81 by %c16_i32_24 dim 1 : vector<8x256xf32>, i32 -> vector<8x256xf32>
    %87 = vector.extract_strided_slice %0 {offsets = [1, 0], sizes = [1, 256], strides = [1, 1]} : vector<9x256xf32> to vector<1x256xf32>
    %88 = vector.broadcast %87 : vector<1x256xf32> to vector<8x256xf32>
    %89 = arith.mulf %86, %88 : vector<8x256xf32>
    %c15_i32_25 = arith.constant 15 : i32
    %90 = tpu.dynamic_rotate %81 by %c15_i32_25 dim 1 : vector<8x256xf32>, i32 -> vector<8x256xf32>
    %91 = vector.extract_strided_slice %0 {offsets = [2, 0], sizes = [1, 256], strides = [1, 1]} : vector<9x256xf32> to vector<1x256xf32>
    %92 = vector.broadcast %91 : vector<1x256xf32> to vector<8x256xf32>
    %93 = arith.mulf %90, %92 : vector<8x256xf32>
    %c1_i32_26 = arith.constant 1 : i32
    %94 = tpu.dynamic_rotate %81 by %c1_i32_26 dim 1 : vector<8x256xf32>, i32 -> vector<8x256xf32>
    %95 = vector.extract_strided_slice %0 {offsets = [3, 0], sizes = [1, 256], strides = [1, 1]} : vector<9x256xf32> to vector<1x256xf32>
    %96 = vector.broadcast %95 : vector<1x256xf32> to vector<8x256xf32>
    %97 = arith.mulf %94, %96 : vector<8x256xf32>
    %98 = vector.extract_strided_slice %0 {offsets = [4, 0], sizes = [1, 256], strides = [1, 1]} : vector<9x256xf32> to vector<1x256xf32>
    %99 = vector.broadcast %98 : vector<1x256xf32> to vector<8x256xf32>
    %100 = arith.mulf %81, %99 : vector<8x256xf32>
    %c255_i32_27 = arith.constant 255 : i32
    %101 = tpu.dynamic_rotate %81 by %c255_i32_27 dim 1 : vector<8x256xf32>, i32 -> vector<8x256xf32>
    %102 = vector.extract_strided_slice %0 {offsets = [5, 0], sizes = [1, 256], strides = [1, 1]} : vector<9x256xf32> to vector<1x256xf32>
    %103 = vector.broadcast %102 : vector<1x256xf32> to vector<8x256xf32>
    %104 = arith.mulf %101, %103 : vector<8x256xf32>
    %c241_i32_28 = arith.constant 241 : i32
    %105 = tpu.dynamic_rotate %81 by %c241_i32_28 dim 1 : vector<8x256xf32>, i32 -> vector<8x256xf32>
    %106 = vector.extract_strided_slice %0 {offsets = [6, 0], sizes = [1, 256], strides = [1, 1]} : vector<9x256xf32> to vector<1x256xf32>
    %107 = vector.broadcast %106 : vector<1x256xf32> to vector<8x256xf32>
    %108 = arith.mulf %105, %107 : vector<8x256xf32>
    %c240_i32_29 = arith.constant 240 : i32
    %109 = tpu.dynamic_rotate %81 by %c240_i32_29 dim 1 : vector<8x256xf32>, i32 -> vector<8x256xf32>
    %110 = vector.extract_strided_slice %0 {offsets = [7, 0], sizes = [1, 256], strides = [1, 1]} : vector<9x256xf32> to vector<1x256xf32>
    %111 = vector.broadcast %110 : vector<1x256xf32> to vector<8x256xf32>
    %112 = arith.mulf %109, %111 : vector<8x256xf32>
    %c239_i32_30 = arith.constant 239 : i32
    %113 = tpu.dynamic_rotate %81 by %c239_i32_30 dim 1 : vector<8x256xf32>, i32 -> vector<8x256xf32>
    %114 = vector.extract_strided_slice %0 {offsets = [8, 0], sizes = [1, 256], strides = [1, 1]} : vector<9x256xf32> to vector<1x256xf32>
    %115 = vector.broadcast %114 : vector<1x256xf32> to vector<8x256xf32>
    %116 = arith.mulf %113, %115 : vector<8x256xf32>
    %117 = tpu.concatenate %85, %89, %93, %97, %100, %104, %108, %112, %116 in 0 : vector<8x256xf32>, vector<8x256xf32>, vector<8x256xf32>, vector<8x256xf32>, vector<8x256xf32>, vector<8x256xf32>, vector<8x256xf32>, vector<8x256xf32>, vector<8x256xf32> -> vector<72x256xf32>
    %c0_31 = arith.constant 0 : index
    %c0_32 = arith.constant 0 : index
    %118 = vector.load %arg7[%c0_31, %c0_32] : memref<8x72xbf16, #tpu.memory_space<vmem>>, vector<8x72xbf16>
    %c0_33 = arith.constant 0 : index
    %c0_34 = arith.constant 0 : index
    %119 = vector.load %arg8[%c0_33, %c0_34] : memref<8x1xf32, #tpu.memory_space<vmem>>, vector<8x1xf32>
    %120 = arith.truncf %117 : vector<72x256xf32> to vector<72x256xbf16>
    %cst_35 = arith.constant dense<0.000000e+00> : vector<8x256xf32>
    %121 = tpu.matmul %118, %120, %cst_35 {dimension_numbers = #tpu.dot_dimension_numbers<[1], [0], [0], [1], [0, 0, 1, 1], [], []>} : vector<8x72xbf16>, vector<72x256xbf16>, vector<8x256xf32> -> vector<8x256xf32>
    %122 = vector.broadcast %119 : vector<8x1xf32> to vector<8x256xf32>
    %123 = arith.addf %121, %122 : vector<8x256xf32>
    %124 = math.tanh %123 : vector<8x256xf32>
    %125 = vector.shape_cast %124 : vector<8x256xf32> to vector<1x8x256xf32>
    %c0_36 = arith.constant 0 : index
    %c0_37 = arith.constant 0 : index
    %c0_38 = arith.constant 0 : index
    %126 = vector.load %arg9[%c0_36, %c0_37, %c0_38] : memref<1x8x256xf32, #tpu.memory_space<vmem>>, vector<1x8x256xf32>
    tpu.vector_store %arg9[%c0_36, %c0_37, %c0_38], %125 {strides = array<i32>} : memref<1x8x256xf32, #tpu.memory_space<vmem>>, vector<1x8x256xf32>,
    return
  }
  func.func @transform_0(%arg0: i32) -> (i32, i32, i32) {
    %c0_i32 = arith.constant 0 : i32
    %c0_i32_0 = arith.constant 0 : i32
    %c0_i32_1 = arith.constant 0 : i32
    return %arg0, %c0_i32, %c0_i32_0 : i32, i32, i32
  }
  func.func @transform_1(%arg0: i32) -> (i32, i32) {
    %c0_i32 = arith.constant 0 : i32
    %c0_i32_0 = arith.constant 0 : i32
    %c0_i32_1 = arith.constant 0 : i32
    return %c0_i32, %c0_i32_0 : i32, i32
  }
  func.func @transform_2(%arg0: i32) -> (i32, i32) {
    %c0_i32 = arith.constant 0 : i32
    %c0_i32_0 = arith.constant 0 : i32
    %c0_i32_1 = arith.constant 0 : i32
    return %c0_i32, %c0_i32_0 : i32, i32
  }
  func.func @transform_3(%arg0: i32) -> (i32, i32) {
    %c0_i32 = arith.constant 0 : i32
    %c0_i32_0 = arith.constant 0 : i32
    %c0_i32_1 = arith.constant 0 : i32
    return %c0_i32, %c0_i32_0 : i32, i32
  }
  func.func @transform_4(%arg0: i32) -> (i32, i32) {
    %c0_i32 = arith.constant 0 : i32
    %c0_i32_0 = arith.constant 0 : i32
    %c0_i32_1 = arith.constant 0 : i32
    return %c0_i32, %c0_i32_0 : i32, i32
  }
  func.func @transform_5(%arg0: i32) -> (i32, i32) {
    %c0_i32 = arith.constant 0 : i32
    %c0_i32_0 = arith.constant 0 : i32
    %c0_i32_1 = arith.constant 0 : i32
    return %c0_i32, %c0_i32_0 : i32, i32
  }
  func.func @transform_6(%arg0: i32) -> (i32, i32) {
    %c0_i32 = arith.constant 0 : i32
    %c0_i32_0 = arith.constant 0 : i32
    %c0_i32_1 = arith.constant 0 : i32
    return %c0_i32, %c0_i32_0 : i32, i32
  }
  func.func @transform_7(%arg0: i32) -> (i32, i32) {
    %c0_i32 = arith.constant 0 : i32
    %c0_i32_0 = arith.constant 0 : i32
    %c0_i32_1 = arith.constant 0 : i32
    return %c0_i32, %c0_i32_0 : i32, i32
  }
  func.func @transform_8(%arg0: i32) -> (i32, i32, i32) {
    %c0_i32 = arith.constant 0 : i32
    %c0_i32_0 = arith.constant 0 : i32
    %c0_i32_1 = arith.constant 0 : i32
    return %arg0, %c0_i32, %c0_i32_0 : i32, i32, i32
  }
}

</mosaic_0001>

<llo_original>
// kernel: improved_net_forward.1
$region0: #{improved_net_forward.1}
  #allocation0 [shape = 'u32[]', space=smem, size = 0x4, offset = 0x4, fixed_abs, tag = 'smem constant byte address 0x4 - core index']
  #allocation1 [shape = 'u32[144,128]{1,0:T(1,128)}', space=vmem, size = 0x12000, scoped, tag = 'internal scratch']
  %s0 = inlined_call_operand.vmem [shape: f32[2,1,256], index: 0, kind: input, shape index: {}]
  %s1 = inlined_call_operand.vmem [shape: f32[9,256], index: 1, kind: input, shape index: {}]
  %s2 = inlined_call_operand.vmem [shape: bf16[8,9], index: 2, kind: input, shape index: {}]
  %s3 = inlined_call_operand.vmem [shape: f32[8,1], index: 3, kind: input, shape index: {}]
  %s4 = inlined_call_operand.vmem [shape: bf16[8,72], index: 4, kind: input, shape index: {}]
  %s5 = inlined_call_operand.vmem [shape: f32[8,1], index: 5, kind: input, shape index: {}]
  %s6 = inlined_call_operand.vmem [shape: bf16[8,72], index: 6, kind: input, shape index: {}]
  %s7 = inlined_call_operand.vmem [shape: f32[8,1], index: 7, kind: input, shape index: {}]
  %s8 = inlined_call_operand.vmem [shape: f32[2,8,256], index: 8, kind: output, shape index: {}]
  %s9 = sld [smem:[#allocation0]]
  $region65: #{improved_net_forward.1} parent=0
    _
  %s11 = ssub.s32 1, %s9
  %s12 = scalar_select 0, %s11, %s9
  loop: start=0, step=1, limit=4
  $region2: #{improved_net_forward.1} parent=0 // loop_pre_header
    _
  $region3: #{improved_net_forward.1} parent=0 // loop_header
    %s14 = sphi 0, %s18
    %p15 = scmp.ge.s32.totalorder %s14, 4
    %s24 = sphi 0, %s26
    %s27 = sphi 0, %s24
    %s28 = sphi 0, %s27
    %s44 = sphi 0, %s28
    %s48 = sphi 0, %s48
    %s50 = sphi 0, %s48
    %s51 = sphi 0, %s50
    %s65 = sphi 0, %s51
    %s69 = sphi 0, %s69
    %s71 = sphi 0, %s69
    %s72 = sphi 0, %s71
    %s86 = sphi 0, %s72
    %s90 = sphi 0, %s90
    %s92 = sphi 0, %s90
    %s93 = sphi 0, %s92
    %s107 = sphi 0, %s93
    %s111 = sphi 0, %s111
    %s113 = sphi 0, %s111
    %s114 = sphi 0, %s113
    %s128 = sphi 0, %s114
    %s132 = sphi 0, %s132
    %s134 = sphi 0, %s132
    %s135 = sphi 0, %s134
    %s149 = sphi 0, %s135
    %s153 = sphi 0, %s153
    %s155 = sphi 0, %s153
    %s156 = sphi 0, %s155
    %s170 = sphi 0, %s156
    %s174 = sphi 0, %s174
    %s176 = sphi 0, %s174
    %s177 = sphi 0, %s176
    %s191 = sphi 0, %s177
    %s197 = sphi 0, %s199
    %s200 = sphi 0, %s197
    %s201 = sphi 0, %s200
    %s217 = sphi 0, %s201
  $region4: #{improved_net_forward.1} parent=0 // loop_header_branch
    %17 = sbr.rel (%p15) target = $region8
  $region5: #{improved_net_forward.1} parent=0 // loop_body
    %s19 = ssub.s32 %s14, 1
    %s20 = ssub.s32 %s14, 2
    %s21 = sadd.s32 %s14, 1
    %s22 = ssub.s32 %s14, %s21
    %p23 = scmp.eq.s32.totalorder %s22, 0
    %s25 = sadd.s32 %s24, 1
    %s26 = scalar_select %p23, %s24, %s25
    %p29 = pneg %p23
    %p30 = scmp.eq.s32.totalorder %s14, 1
    %p31 = por %p29, %p30
    %p32 = scmp.ne.s32.totalorder %s24, %s27
    %p33 = scmp.eq.s32.totalorder %s14, 0
    %p34 = por %p32, %p33
    %p35 = scmp.ne.s32.totalorder %s24, %s27
    %p36 = scmp.eq.s32.totalorder %s19, 1
    %p37 = por %p35, %p36
    %p38 = scmp.ne.s32.totalorder %s27, %s28
    %p39 = scmp.eq.s32.totalorder %s19, 0
    %p40 = por %p38, %p39
    %p41 = scmp.ne.s32.totalorder %s27, %s28
    %p42 = scmp.eq.s32.totalorder %s20, 1
    %p43 = por %p41, %p42
    %p45 = scmp.ne.s32.totalorder %s28, %s44
    %p46 = scmp.eq.s32.totalorder %s20, 0
    %p47 = por %p45, %p46
    %s49 = sadd.s32 %s48, 1
    %p52 = scmp.eq.s32.totalorder %s14, 1
    %p53 = scmp.ne.s32.totalorder %s48, %s50
    %p54 = scmp.eq.s32.totalorder %s14, 0
    %p55 = por %p53, %p54
    %p56 = scmp.ne.s32.totalorder %s48, %s50
    %p57 = scmp.eq.s32.totalorder %s19, 1
    %p58 = por %p56, %p57
    %p59 = scmp.ne.s32.totalorder %s50, %s51
    %p60 = scmp.eq.s32.totalorder %s19, 0
    %p61 = por %p59, %p60
    %p62 = scmp.ne.s32.totalorder %s50, %s51
    %p63 = scmp.eq.s32.totalorder %s20, 1
    %p64 = por %p62, %p63
    %p66 = scmp.ne.s32.totalorder %s51, %s65
    %p67 = scmp.eq.s32.totalorder %s20, 0
    %p68 = por %p66, %p67
    %s70 = sadd.s32 %s69, 1
    %p73 = scmp.eq.s32.totalorder %s14, 1
    %p74 = scmp.ne.s32.totalorder %s69, %s71
    %p75 = scmp.eq.s32.totalorder %s14, 0
    %p76 = por %p74, %p75
    %p77 = scmp.ne.s32.totalorder %s69, %s71
    %p78 = scmp.eq.s32.totalorder %s19, 1
    %p79 = por %p77, %p78
    %p80 = scmp.ne.s32.totalorder %s71, %s72
    %p81 = scmp.eq.s32.totalorder %s19, 0
    %p82 = por %p80, %p81
    %p83 = scmp.ne.s32.totalorder %s71, %s72
    %p84 = scmp.eq.s32.totalorder %s20, 1
    %p85 = por %p83, %p84
    %p87 = scmp.ne.s32.totalorder %s72, %s86
    %p88 = scmp.eq.s32.totalorder %s20, 0
    %p89 = por %p87, %p88
    %s91 = sadd.s32 %s90, 1
    %p94 = scmp.eq.s32.totalorder %s14, 1
    %p95 = scmp.ne.s32.totalorder %s90, %s92
    %p96 = scmp.eq.s32.totalorder %s14, 0
    %p97 = por %p95, %p96
    %p98 = scmp.ne.s32.totalorder %s90, %s92
    %p99 = scmp.eq.s32.totalorder %s19, 1
    %p100 = por %p98, %p99
    %p101 = scmp.ne.s32.totalorder %s92, %s93
    %p102 = scmp.eq.s32.totalorder %s19, 0
    %p103 = por %p101, %p102
    %p104 = scmp.ne.s32.totalorder %s92, %s93
    %p105 = scmp.eq.s32.totalorder %s20, 1
    %p106 = por %p104, %p105
    %p108 = scmp.ne.s32.totalorder %s93, %s107
    %p109 = scmp.eq.s32.totalorder %s20, 0
    %p110 = por %p108, %p109
    %s112 = sadd.s32 %s111, 1
    %p115 = scmp.eq.s32.totalorder %s14, 1
    %p116 = scmp.ne.s32.totalorder %s111, %s113
    %p117 = scmp.eq.s32.totalorder %s14, 0
    %p118 = por %p116, %p117
    %p119 = scmp.ne.s32.totalorder %s111, %s113
    %p120 = scmp.eq.s32.totalorder %s19, 1
    %p121 = por %p119, %p120
    %p122 = scmp.ne.s32.totalorder %s113, %s114
    %p123 = scmp.eq.s32.totalorder %s19, 0
    %p124 = por %p122, %p123
    %p125 = scmp.ne.s32.totalorder %s113, %s114
    %p126 = scmp.eq.s32.totalorder %s20, 1
    %p127 = por %p125, %p126
    %p129 = scmp.ne.s32.totalorder %s114, %s128
    %p130 = scmp.eq.s32.totalorder %s20, 0
    %p131 = por %p129, %p130
    %s133 = sadd.s32 %s132, 1
    %p136 = scmp.eq.s32.totalorder %s14, 1
    %p137 = scmp.ne.s32.totalorder %s132, %s134
    %p138 = scmp.eq.s32.totalorder %s14, 0
    %p139 = por %p137, %p138
    %p140 = scmp.ne.s32.totalorder %s132, %s134
    %p141 = scmp.eq.s32.totalorder %s19, 1
    %p142 = por %p140, %p141
    %p143 = scmp.ne.s32.totalorder %s134, %s135
    %p144 = scmp.eq.s32.totalorder %s19, 0
    %p145 = por %p143, %p144
    %p146 = scmp.ne.s32.totalorder %s134, %s135
    %p147 = scmp.eq.s32.totalorder %s20, 1
    %p148 = por %p146, %p147
    %p150 = scmp.ne.s32.totalorder %s135, %s149
    %p151 = scmp.eq.s32.totalorder %s20, 0
    %p152 = por %p150, %p151
    %s154 = sadd.s32 %s153, 1
    %p157 = scmp.eq.s32.totalorder %s14, 1
    %p158 = scmp.ne.s32.totalorder %s153, %s155
    %p159 = scmp.eq.s32.totalorder %s14, 0
    %p160 = por %p158, %p159
    %p161 = scmp.ne.s32.totalorder %s153, %s155
    %p162 = scmp.eq.s32.totalorder %s19, 1
    %p163 = por %p161, %p162
    %p164 = scmp.ne.s32.totalorder %s155, %s156
    %p165 = scmp.eq.s32.totalorder %s19, 0
    %p166 = por %p164, %p165
    %p167 = scmp.ne.s32.totalorder %s155, %s156
    %p168 = scmp.eq.s32.totalorder %s20, 1
    %p169 = por %p167, %p168
    %p171 = scmp.ne.s32.totalorder %s156, %s170
    %p172 = scmp.eq.s32.totalorder %s20, 0
    %p173 = por %p171, %p172
    %s175 = sadd.s32 %s174, 1
    %p178 = scmp.eq.s32.totalorder %s14, 1
    %p179 = scmp.ne.s32.totalorder %s174, %s176
    %p180 = scmp.eq.s32.totalorder %s14, 0
    %p181 = por %p179, %p180
    %p182 = scmp.ne.s32.totalorder %s174, %s176
    %p183 = scmp.eq.s32.totalorder %s19, 1
    %p184 = por %p182, %p183
    %p185 = scmp.ne.s32.totalorder %s176, %s177
    %p186 = scmp.eq.s32.totalorder %s19, 0
    %p187 = por %p185, %p186
    %p188 = scmp.ne.s32.totalorder %s176, %s177
    %p189 = scmp.eq.s32.totalorder %s20, 1
    %p190 = por %p188, %p189
    %p192 = scmp.ne.s32.totalorder %s177, %s191
    %p193 = scmp.eq.s32.totalorder %s20, 0
    %p194 = por %p192, %p193
    %s195 = ssub.s32 %s14, %s21
    %p196 = scmp.eq.s32.totalorder %s195, 0
    %s198 = sadd.s32 %s197, 1
    %s199 = scalar_select %p196, %s197, %s198
    %p202 = pneg %p196
    %p203 = scmp.eq.s32.totalorder %s14, 1
    %p204 = por %p202, %p203
    %p205 = scmp.ne.s32.totalorder %s197, %s200
    %p206 = scmp.eq.s32.totalorder %s14, 0
    %p207 = por %p205, %p206
    %p208 = scmp.ne.s32.totalorder %s197, %s200
    %p209 = scmp.eq.s32.totalorder %s19, 1
    %p210 = por %p208, %p209
    %p211 = scmp.ne.s32.totalorder %s200, %s201
    %p212 = scmp.eq.s32.totalorder %s19, 0
    %p213 = por %p211, %p212
    %p214 = scmp.ne.s32.totalorder %s200, %s201
    %p215 = scmp.eq.s32.totalorder %s20, 1
    %p216 = por %p214, %p215
    %p218 = scmp.ne.s32.totalorder %s201, %s217
    %p219 = scmp.eq.s32.totalorder %s20, 0
    %p220 = por %p218, %p219
    %p221 = scmp.le.s32.totalorder 1, %s14
    %p222 = scmp.lt.s32.totalorder %s14, 3
    %p223 = pnand %p221, %p222
    %p224 = pneg %p223
    // Predicated region
    $region9: #{improved_net_forward.1} parent=5 // pred_check
      _
    $region10: #{improved_net_forward.1} parent=5 // pred_check_branch
      %226 = sbr.rel (%p223) target = $region12
    $region11: #{improved_net_forward.1} parent=5 // pred_region
      %s227 = ssub.s32 %s14, 1
      // Predicated region
      $region13: #{improved_net_forward.1} parent=11 // pred_check
        %p228 = pneg %p61
      $region14: #{improved_net_forward.1} parent=11 // pred_check_branch
        %230 = sbr.rel (%p228) target = $region16
      $region15: #{improved_net_forward.1} parent=11 // pred_region
        _
      $region16: #{improved_net_forward.1} parent=11 // pred_fallthru
        _
      // Predicated region
      $region17: #{improved_net_forward.1} parent=11 // pred_check
        %p231 = pneg %p82
      $region18: #{improved_net_forward.1} parent=11 // pred_check_branch
        %233 = sbr.rel (%p231) target = $region20
      $region19: #{improved_net_forward.1} parent=11 // pred_region
        _
      $region20: #{improved_net_forward.1} parent=11 // pred_fallthru
        _
      // Predicated region
      $region21: #{improved_net_forward.1} parent=11 // pred_check
        %p234 = pneg %p103
      $region22: #{improved_net_forward.1} parent=11 // pred_check_branch
        %236 = sbr.rel (%p234) target = $region24
      $region23: #{improved_net_forward.1} parent=11 // pred_region
        _
      $region24: #{improved_net_forward.1} parent=11 // pred_fallthru
        _
      // Predicated region
      $region25: #{improved_net_forward.1} parent=11 // pred_check
        %p237 = pneg %p124
      $region26: #{improved_net_forward.1} parent=11 // pred_check_branch
        %239 = sbr.rel (%p237) target = $region28
      $region27: #{improved_net_forward.1} parent=11 // pred_region
        _
      $region28: #{improved_net_forward.1} parent=11 // pred_fallthru
        _
      // Predicated region
      $region29: #{improved_net_forward.1} parent=11 // pred_check
        %p240 = pneg %p145
      $region30: #{improved_net_forward.1} parent=11 // pred_check_branch
        %242 = sbr.rel (%p240) target = $region32
      $region31: #{improved_net_forward.1} parent=11 // pred_region
        _
      $region32: #{improved_net_forward.1} parent=11 // pred_fallthru
        _
      // Predicated region
      $region33: #{improved_net_forward.1} parent=11 // pred_check
        %p243 = pneg %p166
      $region34: #{improved_net_forward.1} parent=11 // pred_check_branch
        %245 = sbr.rel (%p243) target = $region36
      $region35: #{improved_net_forward.1} parent=11 // pred_region
        _
      $region36: #{improved_net_forward.1} parent=11 // pred_fallthru
        _
      // Predicated region
      $region37: #{improved_net_forward.1} parent=11 // pred_check
        %p246 = pneg %p187
      $region38: #{improved_net_forward.1} parent=11 // pred_check_branch
        %248 = sbr.rel (%p246) target = $region40
      $region39: #{improved_net_forward.1} parent=11 // pred_region
        _
      $region40: #{improved_net_forward.1} parent=11 // pred_fallthru
        _
    $region12: #{improved_net_forward.1} parent=5 // pred_fallthru
      _
    %p249 = scmp.lt.s32.totalorder %s14, 2
    // Predicated region
    $region41: #{improved_net_forward.1} parent=5 // pred_check
      %p250 = pneg %p249
    $region42: #{improved_net_forward.1} parent=5 // pred_check_branch
      %252 = sbr.rel (%p250) target = $region44
    $region43: #{improved_net_forward.1} parent=5 // pred_region
      // Predicated region
      $region45: #{improved_net_forward.1} parent=43 // pred_check
        %p253 = pneg %p34
      $region46: #{improved_net_forward.1} parent=43 // pred_check_branch
        %255 = sbr.rel (%p253) target = $region48
      $region47: #{improved_net_forward.1} parent=43 // pred_region
        %p256 = scmp.lt.s32.totalorder %s14, 1
        %s257 = scalar_select %p256, %s14, 1
        %s258 = smul.addr %s257, 2
        %s259 = scalar_lea.vmem %s0, %s258
      $region48: #{improved_net_forward.1} parent=43 // pred_fallthru
        _
    $region44: #{improved_net_forward.1} parent=5 // pred_fallthru
      _
    %p260 = scmp.le.s32.totalorder 1, %s14
    %p261 = scmp.lt.s32.totalorder %s14, 3
    %p262 = pnand %p260, %p261
    %p263 = pneg %p262
    // Predicated region
    $region49: #{improved_net_forward.1} parent=5 // pred_check
      _
    $region50: #{improved_net_forward.1} parent=5 // pred_check_branch
      %265 = sbr.rel (%p262) target = $region52
    $region51: #{improved_net_forward.1} parent=5 // pred_region
      %s266 = ssub.s32 %s14, 1
      %p267 = scmp.lt.s32.totalorder %s19, 1
      %s268 = scalar_select %p267, %s19, 1
      %s269 = smul.addr %s268, 2
      %s270 = scalar_lea.vmem %s0, %s269
      %p271 = pneg %p40
      %p272 = pneg %p37
      %p273 = pneg %p61
      %p274 = pneg %p58
      %p275 = pneg %p82
      %p276 = pneg %p79
      %p277 = pneg %p103
      %p278 = pneg %p100
      %p279 = pneg %p124
      %p280 = pneg %p121
      %p281 = pneg %p145
      %p282 = pneg %p142
      %p283 = pneg %p166
      %p284 = pneg %p163
      %p285 = pneg %p187
      %p286 = pneg %p184
      %p287 = pneg %p213
      %p288 = pneg %p210
      %p289 = scmp.lt.s32.totalorder %s19, 1
      %s290 = scalar_select %p289, %s19, 1
      %s291 = smul.addr %s290, 2
      %s292 = smul.addr %s291, 8
      %s293 = scalar_lea.vmem %s8, %s292
      %p294 = scmp.lt.s32.totalorder %s19, 1
      %s295 = scalar_select %p294, %s19, 1
      %s296 = smul.addr %s295, 2
      %s297 = scalar_lea.vmem %s0, %s296
      %p298 = scmp.lt.s32.totalorder %s19, 1
      %s299 = scalar_select %p298, %s19, 1
      %s300 = smul.addr %s299, 2
      %s301 = smul.addr %s300, 8
      %s302 = scalar_lea.vmem %s8, %s301
      %v304 = vld [vmem:[%s1] sm:$0xff]
      %v305 = vld [vmem:[%s1 + $0x8] sm:$0xff]
      %v306 = vld [vmem:[%s1 + $0x10] sm:$0x1]
      %v307 = vld [vmem:[%s1 + $0x18] sm:$0x1]
      %v308 = vld [vmem:[%s297] sm:$0x3]
      %v310 = vlaneseq
      %v311 = vshrl.u32 %v310, 7
      %v312 = vsub.s32 0, %v311
      %v313 = vrot.slane %v308, %v312
      %v314 = vlaneseq
      %v315 = vshrl.u32 %v314, 7
      %v316 = vsub.s32 1, %v315
      %v317 = vrot.slane %v308, %v316
      %320 = vrot.lane.b32.xlu0 %v313, 17
      %v321 = vpop.permute.xlu0 %320
      %322 = vrot.lane.b32.xlu0 %v317, 17
      %v323 = vpop.permute.xlu0 %322
      %v324 = vlaneseq
      %v325 = vand.u32 %v324, 127
      %vm326 = vcmp.lt.s32.totalorder %v325, 17
      %v327 = vsel %vm326, %v321, %v323
      %v328 = vsel %vm326, %v323, %v321
      %v329 = vmul.f32 %v328, %v304
      %v330 = vmul.f32 %v327, %v305
      %331 = vrot.lane.b32.xlu0 %v313, 16
      %v332 = vpop.permute.xlu0 %331
      %333 = vrot.lane.b32.xlu0 %v317, 16
      %v334 = vpop.permute.xlu0 %333
      %vm335 = vcmp.lt.s32.totalorder %v325, 16
      %v336 = vsel %vm335, %v332, %v334
      %v337 = vsel %vm335, %v334, %v332
      %v340 = vrot.slane %v304, 1
      %v341 = vrot.slane %v305, 1
      %v344 = vmul.f32 %v337, %v340
      %v345 = vmul.f32 %v336, %v341
      %346 = vrot.lane.b32.xlu0 %v313, 15
      %v347 = vpop.permute.xlu0 %346
      %348 = vrot.lane.b32.xlu0 %v317, 15
      %v349 = vpop.permute.xlu0 %348
      %vm350 = vcmp.lt.s32.totalorder %v325, 15
      %v351 = vsel %vm350, %v347, %v349
      %v352 = vsel %vm350, %v349, %v347
      %v353 = vrot.slane %v304, 2
      %v354 = vrot.slane %v305, 2
      %v357 = vmul.f32 %v352, %v353
      %v358 = vmul.f32 %v351, %v354
      %359 = vrot.lane.b32.xlu0 %v313, 1
      %v360 = vpop.permute.xlu0 %359
      %361 = vrot.lane.b32.xlu0 %v317, 1
      %v362 = vpop.permute.xlu0 %361
      %vm363 = vcmp.lt.s32.totalorder %v325, 1
      %v364 = vsel %vm363, %v360, %v362
      %v365 = vsel %vm363, %v362, %v360
      %v366 = vrot.slane %v304, 3
      %v367 = vrot.slane %v305, 3
      %v370 = vmul.f32 %v365, %v366
      %v371 = vmul.f32 %v364, %v367
      %v372 = vcombine.high %v304, %v305
      %v374 = vunpack.c.l.s4 1966171168
      %v375 = vunpack.c.0.s8 %v374
      %v376 = vlaneseq
      %v377 = vshrl.u32 %v376, 7
      %v378 = vsub.s32 %v375, %v377
      %v379 = vrot.slane %v372, %v378
      %v381 = vunpack.c.l.s4 1966171168
      %v382 = vunpack.c.0.s8 %v381
      %v383 = vlaneseq
      %v384 = vshrl.u32 %v383, 7
      %v385 = vsub.s32 %v382, %v384
      %v386 = vrot.slane %v379, %v385
      %v388 = vmul.f32 %v308, %v386
      %389 = vrot.lane.b32.xlu0 %v313, 127
      %v390 = vpop.permute.xlu0 %389
      %391 = vrot.lane.b32.xlu0 %v317, 127
      %v392 = vpop.permute.xlu0 %391
      %vm393 = vcmp.lt.s32.totalorder %v325, 127
      %v394 = vsel %vm393, %v390, %v392
      %v395 = vsel %vm393, %v392, %v390
      %v396 = vrot.slane %v304, 5
      %v397 = vrot.slane %v305, 5
      %v400 = vmul.f32 %v394, %v396
      %v401 = vmul.f32 %v395, %v397
      %402 = vrot.lane.b32.xlu0 %v313, 113
      %v403 = vpop.permute.xlu0 %402
      %404 = vrot.lane.b32.xlu0 %v317, 113
      %v405 = vpop.permute.xlu0 %404
      %vm406 = vcmp.lt.s32.totalorder %v325, 113
      %v407 = vsel %vm406, %v403, %v405
      %v408 = vsel %vm406, %v405, %v403
      %v409 = vrot.slane %v304, 6
      %v410 = vrot.slane %v305, 6
      %v413 = vmul.f32 %v407, %v409
      %v414 = vmul.f32 %v408, %v410
      %415 = vrot.lane.b32.xlu0 %v313, 112
      %v416 = vpop.permute.xlu0 %415
      %417 = vrot.lane.b32.xlu0 %v317, 112
      %v418 = vpop.permute.xlu0 %417
      %vm419 = vcmp.lt.s32.totalorder %v325, 112
      %v420 = vsel %vm419, %v416, %v418
      %v421 = vsel %vm419, %v418, %v416
      %v422 = vrot.slane %v304, 7
      %v423 = vrot.slane %v305, 7
      %v426 = vmul.f32 %v420, %v422
      %v427 = vmul.f32 %v421, %v423
      %428 = vrot.lane.b32.xlu0 %v313, 111
      %v429 = vpop.permute.xlu0 %428
      %430 = vrot.lane.b32.xlu0 %v317, 111
      %v431 = vpop.permute.xlu0 %430
      %vm432 = vcmp.lt.s32.totalorder %v325, 111
      %v433 = vsel %vm432, %v429, %v431
      %v434 = vsel %vm432, %v431, %v429
      %v435 = vmul.f32 %v433, %v306
      %v436 = vmul.f32 %v434, %v307
      %v439 = vrot.slane %v344, 7
      %v440 = vrot.slane %v345, 7
      %v445 = vrot.slane %v357, 6
      %v446 = vrot.slane %v358, 6
      %v451 = vrot.slane %v370, 5
      %v452 = vrot.slane %v371, 5
      %v456 = vlaneseq
      %v457 = vshrl.u32 %v456, 7
      %v458 = vsub.s32 0, %v457
      %v459 = vrot.slane %v388, %v458
      %v460 = vlaneseq
      %v461 = vshrl.u32 %v460, 7
      %v462 = vsub.s32 1, %v461
      %v463 = vrot.slane %v388, %v462
      %v468 = vrot.slane %v400, 3
      %v469 = vrot.slane %v401, 3
      %v474 = vrot.slane %v413, 2
      %v475 = vrot.slane %v414, 2
      %v480 = vrot.slane %v426, 1
      %v481 = vrot.slane %v427, 1
      %vm484 = vcmask 1040384
      %v485 = vsel %vm484, %v329, %v439
      %v486 = vsel %vm484, %v330, %v440
      %vm487 = vcmask 1041408
      %v488 = vsel %vm487, %v485, %v445
      %v489 = vsel %vm487, %v486, %v446
      %vm490 = vcmask 1042432
      %v491 = vsel %vm490, %v488, %v451
      %v492 = vsel %vm490, %v489, %v452
      %vm493 = vcmask 1043456
      %v494 = vsel %vm493, %v491, %v459
      %v495 = vsel %vm493, %v492, %v463
      %vm496 = vcmask 1044480
      %v497 = vsel %vm496, %v494, %v468
      %v498 = vsel %vm496, %v495, %v469
      %vm499 = vcmask 1045504
      %v500 = vsel %vm499, %v497, %v474
      %v501 = vsel %vm499, %v498, %v475
      %vm502 = vcmask 1046528
      %v503 = vsel %vm502, %v500, %v480
      %v504 = vsel %vm502, %v501, %v481
      %v505 = vld [vmem:[%s2] sm:$0xf]
      %v506 = vld [vmem:[%s3] sm:$0xff]
      %v507 = vpack.c.bf16 %v435, %v503
      %v508 = vpack.c.bf16 %v436, %v504
      %510 = vset.pattern.permute.xlu0 0
      %511 = vperm.xlu0 %510, %v506
      %v512 = vpop.permute.xlu0 %511
      %vm514 = vcmask 72704
      %v516 = vsel %vm514, %v505, 0
      %v518 = vsel %vm493, 4294967295, 65535
      %v519 = vsel %vm496, %v518, 0
      %v521 = vand.u32 %v507, %v519
      %v524 = vand.u32 %v508, %v519
      %526 = vmatprep.subr.bf16.mxu0 0
      %527 = vmatpush1.bf16.msra.mxu0 0
      %528 = vmatprep.subr.bf16.mxu0 0
      %529 = vmatpush1.bf16.msra.mxu0 0
      %530 = vmatprep.subr.bf16.mxu0 0
      %531 = vmatpush1.bf16.msra.mxu0 0
      %532 = vmatprep.subr.bf16.mxu0 0
      %533 = vmatpush1.bf16.msra.mxu0 0
      %534 = vmatprep.subr.bf16.mxu0 0
      %535 = vmatpush1.bf16.msra.mxu0 0
      %536 = vmatprep.subr.bf16.mxu0 0
      %537 = vmatpush1.bf16.msra.mxu0 0
      %538 = vmatprep.subr.bf16.mxu0 0
      %539 = vmatpush1.bf16.msra.mxu0 0
      %540 = vmatprep.subr.bf16.mxu0 %v524
      %541 = vmatpush1.bf16.msra.mxu0 %v521
      %542 = vmatprep.subr.bf16.mxu0 0
      %543 = vmatpush2.bf16.msra.mxu0 0
      %544 = vmatprep.subr.bf16.mxu0 0
      %545 = vmatpush2.bf16.msra.mxu0 0
      %546 = vmatprep.subr.bf16.mxu0 0
      %547 = vmatpush2.bf16.msra.mxu0 0
      %548 = vmatprep.subr.bf16.mxu0 0
      %549 = vmatpush2.bf16.msra.mxu0 0
      %550 = vmatprep.subr.bf16.mxu0 0
      %551 = vmatpush2.bf16.msra.mxu0 0
      %552 = vmatprep.subr.bf16.mxu0 0
      %553 = vmatpush2.bf16.msra.mxu0 0
      %554 = vmatprep.subr.bf16.mxu0 0
      %555 = vmatpush2.bf16.msra.mxu0 0
      %556 = vmatprep.subr.bf16.mxu0 0
      %557 = vmatpush2.bf16.msra.mxu0 0
      %558 = vmatprep.mubr.bf16.mxu0 0
      %559 = vmatmul.mubr.bf16.gmra.mxu0 %v516
      %v560 = vpop.f32.mrf.mxu0
      %v561 = vadd.f32 %v512, %v560
      %v562 = vpop.f32.mrf.mxu0
      %v563 = vadd.f32 %v512, %v562
      %v564 = vpop.f32.mrf.mxu0
      %v565 = vpop.f32.mrf.mxu0
      %566 = vdwg.mxu0
      %v567 = vmax.f32 %v561, 0.0
      %v568 = vmax.f32 %v563, 0.0
      %v569 = vld [vmem:[%s4] sm:$0xf]
      %v570 = vld [vmem:[%s5] sm:$0xff]
      %571 = vrot.lane.b32.xlu0 %v567, 17
      %v572 = vpop.permute.xlu0 %571
      %573 = vrot.lane.b32.xlu0 %v568, 17
      %v574 = vpop.permute.xlu0 %573
      %v575 = vsel %vm326, %v572, %v574
      %v576 = vsel %vm326, %v574, %v572
      %v577 = vlaneseq
      %v578 = vshrl.u32 %v577, 7
      %v579 = vsub.s32 0, %v578
      %v580 = vrot.slane %v304, %v579
      %v581 = vlaneseq
      %v582 = vshrl.u32 %v581, 7
      %v583 = vsub.s32 0, %v582
      %v584 = vrot.slane %v305, %v583
      %v585 = vmul.f32 %v576, %v580
      %v586 = vmul.f32 %v575, %v584
      %587 = vrot.lane.b32.xlu0 %v567, 16
      %v588 = vpop.permute.xlu0 %587
      %589 = vrot.lane.b32.xlu0 %v568, 16
      %v590 = vpop.permute.xlu0 %589
      %v591 = vsel %vm335, %v588, %v590
      %v592 = vsel %vm335, %v590, %v588
      %v593 = vlaneseq
      %v594 = vshrl.u32 %v593, 7
      %v595 = vsub.s32 1, %v594
      %v596 = vrot.slane %v304, %v595
      %v597 = vlaneseq
      %v598 = vshrl.u32 %v597, 7
      %v599 = vsub.s32 1, %v598
      %v600 = vrot.slane %v305, %v599
      %v601 = vmul.f32 %v592, %v596
      %v602 = vmul.f32 %v591, %v600
      %603 = vrot.lane.b32.xlu0 %v567, 15
      %v604 = vpop.permute.xlu0 %603
      %605 = vrot.lane.b32.xlu0 %v568, 15
      %v606 = vpop.permute.xlu0 %605
      %v607 = vsel %vm350, %v604, %v606
      %v608 = vsel %vm350, %v606, %v604
      %v609 = vlaneseq
      %v610 = vshrl.u32 %v609, 7
      %v611 = vsub.s32 2, %v610
      %v612 = vrot.slane %v304, %v611
      %v613 = vlaneseq
      %v614 = vshrl.u32 %v613, 7
      %v615 = vsub.s32 2, %v614
      %v616 = vrot.slane %v305, %v615
      %v617 = vmul.f32 %v608, %v612
      %v618 = vmul.f32 %v607, %v616
      %619 = vrot.lane.b32.xlu0 %v567, 1
      %v620 = vpop.permute.xlu0 %619
      %621 = vrot.lane.b32.xlu0 %v568, 1
      %v622 = vpop.permute.xlu0 %621
      %v623 = vsel %vm363, %v620, %v622
      %v624 = vsel %vm363, %v622, %v620
      %v625 = vlaneseq
      %v626 = vshrl.u32 %v625, 7
      %v627 = vsub.s32 3, %v626
      %v628 = vrot.slane %v304, %v627
      %v629 = vlaneseq
      %v630 = vshrl.u32 %v629, 7
      %v631 = vsub.s32 3, %v630
      %v632 = vrot.slane %v305, %v631
      %v633 = vmul.f32 %v624, %v628
      %v634 = vmul.f32 %v623, %v632
      %v635 = vlaneseq
      %v636 = vshrl.u32 %v635, 7
      %v637 = vsub.s32 4, %v636
      %v638 = vrot.slane %v304, %v637
      %v639 = vlaneseq
      %v640 = vshrl.u32 %v639, 7
      %v641 = vsub.s32 4, %v640
      %v642 = vrot.slane %v305, %v641
      %v643 = vmul.f32 %v567, %v638
      %v644 = vmul.f32 %v568, %v642
      %645 = vrot.lane.b32.xlu0 %v567, 127
      %v646 = vpop.permute.xlu0 %645
      %647 = vrot.lane.b32.xlu0 %v568, 127
      %v648 = vpop.permute.xlu0 %647
      %v649 = vsel %vm393, %v646, %v648
      %v650 = vsel %vm393, %v648, %v646
      %v651 = vlaneseq
      %v652 = vshrl.u32 %v651, 7
      %v653 = vsub.s32 5, %v652
      %v654 = vrot.slane %v304, %v653
      %v655 = vlaneseq
      %v656 = vshrl.u32 %v655, 7
      %v657 = vsub.s32 5, %v656
      %v658 = vrot.slane %v305, %v657
      %v659 = vmul.f32 %v649, %v654
      %v660 = vmul.f32 %v650, %v658
      %661 = vrot.lane.b32.xlu0 %v567, 113
      %v662 = vpop.permute.xlu0 %661
      %663 = vrot.lane.b32.xlu0 %v568, 113
      %v664 = vpop.permute.xlu0 %663
      %v665 = vsel %vm406, %v662, %v664
      %v666 = vsel %vm406, %v664, %v662
      %v667 = vlaneseq
      %v668 = vshrl.u32 %v667, 7
      %v669 = vsub.s32 6, %v668
      %v670 = vrot.slane %v304, %v669
      %v671 = vlaneseq
      %v672 = vshrl.u32 %v671, 7
      %v673 = vsub.s32 6, %v672
      %v674 = vrot.slane %v305, %v673
      %v675 = vmul.f32 %v665, %v670
      %v676 = vmul.f32 %v666, %v674
      %677 = vrot.lane.b32.xlu0 %v567, 112
      %v678 = vpop.permute.xlu0 %677
      %679 = vrot.lane.b32.xlu0 %v568, 112
      %v680 = vpop.permute.xlu0 %679
      %v681 = vsel %vm419, %v678, %v680
      %v682 = vsel %vm419, %v680, %v678
      %v683 = vlaneseq
      %v684 = vshrl.u32 %v683, 7
      %v685 = vsub.s32 7, %v684
      %v686 = vrot.slane %v304, %v685
      %v687 = vlaneseq
      %v688 = vshrl.u32 %v687, 7
      %v689 = vsub.s32 7, %v688
      %v690 = vrot.slane %v305, %v689
      %v691 = vmul.f32 %v681, %v686
      %v692 = vmul.f32 %v682, %v690
      %693 = vrot.lane.b32.xlu0 %v567, 111
      %v694 = vpop.permute.xlu0 %693
      %695 = vrot.lane.b32.xlu0 %v568, 111
      %v696 = vpop.permute.xlu0 %695
      %v697 = vsel %vm432, %v694, %v696
      %v698 = vsel %vm432, %v696, %v694
      %v699 = vlaneseq
      %v700 = vshrl.u32 %v699, 7
      %v701 = vsub.s32 0, %v700
      %v702 = vrot.slane %v306, %v701
      %v703 = vlaneseq
      %v704 = vshrl.u32 %v703, 7
      %v705 = vsub.s32 0, %v704
      %v706 = vrot.slane %v307, %v705
      %v707 = vmul.f32 %v697, %v702
      %v708 = vmul.f32 %v698, %v706
      %v709 = vpack.c.bf16 %v601, %v585
      %v710 = vpack.c.bf16 %v602, %v586
      %v711 = vpack.c.bf16 %v633, %v617
      %v712 = vpack.c.bf16 %v634, %v618
      %v713 = vpack.c.bf16 %v659, %v643
      %v714 = vpack.c.bf16 %v660, %v644
      %v715 = vpack.c.bf16 %v691, %v675
      %v716 = vpack.c.bf16 %v692, %v676
      %v717 = vpack.c.bf16 %v707, %v707
      %v718 = vpack.c.bf16 %v708, %v708
      %720 = vset.pattern.permute.xlu0 0
      %721 = vperm.xlu0 %720, %v570
      %v722 = vpop.permute.xlu0 %721
      %vm724 = vcmask 588800
      %v726 = vsel %vm724, %v569, 0
      %v729 = vsel %vm493, %v717, 0
      %v732 = vsel %vm493, %v718, 0
      %734 = vmatprep.subr.bf16.mxu0 0
      %735 = vmatpush1.bf16.msra.mxu0 0
      %736 = vmatprep.subr.bf16.mxu0 0
      %737 = vmatpush1.bf16.msra.mxu0 0
      %738 = vmatprep.subr.bf16.mxu0 0
      %739 = vmatpush1.bf16.msra.mxu0 0
      %740 = vmatprep.subr.bf16.mxu0 %v732
      %741 = vmatpush1.bf16.msra.mxu0 %v729
      %742 = vmatprep.subr.bf16.mxu0 %v716
      %743 = vmatpush1.bf16.msra.mxu0 %v715
      %744 = vmatprep.subr.bf16.mxu0 %v714
      %745 = vmatpush1.bf16.msra.mxu0 %v713
      %746 = vmatprep.subr.bf16.mxu0 %v712
      %747 = vmatpush1.bf16.msra.mxu0 %v711
      %748 = vmatprep.subr.bf16.mxu0 %v710
      %749 = vmatpush1.bf16.msra.mxu0 %v709
      %750 = vmatprep.subr.bf16.mxu0 0
      %751 = vmatpush2.bf16.msra.mxu0 0
      %752 = vmatprep.subr.bf16.mxu0 0
      %753 = vmatpush2.bf16.msra.mxu0 0
      %754 = vmatprep.subr.bf16.mxu0 0
      %755 = vmatpush2.bf16.msra.mxu0 0
      %756 = vmatprep.subr.bf16.mxu0 0
      %757 = vmatpush2.bf16.msra.mxu0 0
      %758 = vmatprep.subr.bf16.mxu0 0
      %759 = vmatpush2.bf16.msra.mxu0 0
      %760 = vmatprep.subr.bf16.mxu0 0
      %761 = vmatpush2.bf16.msra.mxu0 0
      %762 = vmatprep.subr.bf16.mxu0 0
      %763 = vmatpush2.bf16.msra.mxu0 0
      %764 = vmatprep.subr.bf16.mxu0 0
      %765 = vmatpush2.bf16.msra.mxu0 0
      %766 = vmatprep.mubr.bf16.mxu0 0
      %767 = vmatmul.mubr.bf16.gmra.mxu0 %v726
      %v768 = vpop.f32.mrf.mxu0
      %v769 = vadd.f32 %v722, %v768
      %v770 = vpop.f32.mrf.mxu0
      %v771 = vadd.f32 %v722, %v770
      %v772 = vpop.f32.mrf.mxu0
      %v773 = vpop.f32.mrf.mxu0
      %774 = vdwg.mxu0
      %v775 = vmax.f32 %v769, 0.0
      %v776 = vmax.f32 %v771, 0.0
      %777 = vrot.lane.b32.xlu0 %v775, 17
      %v778 = vpop.permute.xlu0 %777
      %779 = vrot.lane.b32.xlu0 %v776, 17
      %v780 = vpop.permute.xlu0 %779
      %v781 = vsel %vm326, %v778, %v780
      %v782 = vsel %vm326, %v780, %v778
      %v783 = vmul.f32 %v782, %v580
      %v784 = vmul.f32 %v781, %v584
      %785 = vrot.lane.b32.xlu0 %v775, 16
      %v786 = vpop.permute.xlu0 %785
      %787 = vrot.lane.b32.xlu0 %v776, 16
      %v788 = vpop.permute.xlu0 %787
      %v789 = vsel %vm335, %v786, %v788
      %v790 = vsel %vm335, %v788, %v786
      %v791 = vmul.f32 %v790, %v596
      %v792 = vmul.f32 %v789, %v600
      %793 = vrot.lane.b32.xlu0 %v775, 15
      %v794 = vpop.permute.xlu0 %793
      %795 = vrot.lane.b32.xlu0 %v776, 15
      %v796 = vpop.permute.xlu0 %795
      %v797 = vsel %vm350, %v794, %v796
      %v798 = vsel %vm350, %v796, %v794
      %v799 = vmul.f32 %v798, %v612
      %v800 = vmul.f32 %v797, %v616
      %801 = vrot.lane.b32.xlu0 %v775, 1
      %v802 = vpop.permute.xlu0 %801
      %803 = vrot.lane.b32.xlu0 %v776, 1
      %v804 = vpop.permute.xlu0 %803
      %v805 = vsel %vm363, %v802, %v804
      %v806 = vsel %vm363, %v804, %v802
      %v807 = vmul.f32 %v806, %v628
      %v808 = vmul.f32 %v805, %v632
      %v809 = vmul.f32 %v775, %v638
      %v810 = vmul.f32 %v776, %v642
      %811 = vrot.lane.b32.xlu0 %v775, 127
      %v812 = vpop.permute.xlu0 %811
      %813 = vrot.lane.b32.xlu0 %v776, 127
      %v814 = vpop.permute.xlu0 %813
      %v815 = vsel %vm393, %v812, %v814
      %v816 = vsel %vm393, %v814, %v812
      %v817 = vmul.f32 %v815, %v654
      %v818 = vmul.f32 %v816, %v658
      %819 = vrot.lane.b32.xlu0 %v775, 113
      %v820 = vpop.permute.xlu0 %819
      %821 = vrot.lane.b32.xlu0 %v776, 113
      %v822 = vpop.permute.xlu0 %821
      %v823 = vsel %vm406, %v820, %v822
      %v824 = vsel %vm406, %v822, %v820
      %v825 = vmul.f32 %v823, %v670
      %v826 = vmul.f32 %v824, %v674
      %827 = vrot.lane.b32.xlu0 %v775, 112
      %v828 = vpop.permute.xlu0 %827
      %829 = vrot.lane.b32.xlu0 %v776, 112
      %v830 = vpop.permute.xlu0 %829
      %v831 = vsel %vm419, %v828, %v830
      %v832 = vsel %vm419, %v830, %v828
      %v833 = vmul.f32 %v831, %v686
      %v834 = vmul.f32 %v832, %v690
      %835 = vrot.lane.b32.xlu0 %v775, 111
      %v836 = vpop.permute.xlu0 %835
      %837 = vrot.lane.b32.xlu0 %v776, 111
      %v838 = vpop.permute.xlu0 %837
      %v839 = vsel %vm432, %v836, %v838
      %v840 = vsel %vm432, %v838, %v836
      %v841 = vmul.f32 %v839, %v702
      %v842 = vmul.f32 %v840, %v706
      %v843 = vld [vmem:[%s6] sm:$0xf]
      %v844 = vld [vmem:[%s7] sm:$0xff]
      %v845 = vpack.c.bf16 %v791, %v783
      %v846 = vpack.c.bf16 %v792, %v784
      %v847 = vpack.c.bf16 %v807, %v799
      %v848 = vpack.c.bf16 %v808, %v800
      %v849 = vpack.c.bf16 %v817, %v809
      %v850 = vpack.c.bf16 %v818, %v810
      %v851 = vpack.c.bf16 %v833, %v825
      %v852 = vpack.c.bf16 %v834, %v826
      %v853 = vpack.c.bf16 %v841, %v841
      %v854 = vpack.c.bf16 %v842, %v842
      %856 = vset.pattern.permute.xlu0 0
      %857 = vperm.xlu0 %856, %v844
      %v858 = vpop.permute.xlu0 %857
      %v861 = vsel %vm724, %v843, 0
      %v864 = vsel %vm493, %v853, 0
      %v867 = vsel %vm493, %v854, 0
      %869 = vmatprep.subr.bf16.mxu0 0
      %870 = vmatpush1.bf16.msra.mxu0 0
      %871 = vmatprep.subr.bf16.mxu0 0
      %872 = vmatpush1.bf16.msra.mxu0 0
      %873 = vmatprep.subr.bf16.mxu0 0
      %874 = vmatpush1.bf16.msra.mxu0 0
      %875 = vmatprep.subr.bf16.mxu0 %v867
      %876 = vmatpush1.bf16.msra.mxu0 %v864
      %877 = vmatprep.subr.bf16.mxu0 %v852
      %878 = vmatpush1.bf16.msra.mxu0 %v851
      %879 = vmatprep.subr.bf16.mxu0 %v850
      %880 = vmatpush1.bf16.msra.mxu0 %v849
      %881 = vmatprep.subr.bf16.mxu0 %v848
      %882 = vmatpush1.bf16.msra.mxu0 %v847
      %883 = vmatprep.subr.bf16.mxu0 %v846
      %884 = vmatpush1.bf16.msra.mxu0 %v845
      %885 = vmatprep.subr.bf16.mxu0 0
      %886 = vmatpush2.bf16.msra.mxu0 0
      %887 = vmatprep.subr.bf16.mxu0 0
      %888 = vmatpush2.bf16.msra.mxu0 0
      %889 = vmatprep.subr.bf16.mxu0 0
      %890 = vmatpush2.bf16.msra.mxu0 0
      %891 = vmatprep.subr.bf16.mxu0 0
      %892 = vmatpush2.bf16.msra.mxu0 0
      %893 = vmatprep.subr.bf16.mxu0 0
      %894 = vmatpush2.bf16.msra.mxu0 0
      %895 = vmatprep.subr.bf16.mxu0 0
      %896 = vmatpush2.bf16.msra.mxu0 0
      %897 = vmatprep.subr.bf16.mxu0 0
      %898 = vmatpush2.bf16.msra.mxu0 0
      %899 = vmatprep.subr.bf16.mxu0 0
      %900 = vmatpush2.bf16.msra.mxu0 0
      %901 = vmatprep.mubr.bf16.mxu0 0
      %902 = vmatmul.mubr.bf16.gmra.mxu0 %v861
      %v903 = vpop.f32.mrf.mxu0
      %v904 = vadd.f32 %v858, %v903
      %v905 = vpop.f32.mrf.mxu0
      %v906 = vadd.f32 %v858, %v905
      %v907 = vpop.f32.mrf.mxu0
      %v908 = vpop.f32.mrf.mxu0
      %909 = vdwg.mxu0
      %v910 = vtanh.pop %v904
      %v911 = vtanh.pop %v906
      %912 = vst [vmem:[%s302] sm:$0xff] %v910
      %913 = vst [vmem:[%s302 + $0x8] sm:$0xff] %v911
      %p914 = scmp.lt.s32.totalorder %s19, 1
      %s915 = scalar_select %p914, %s19, 1
      %s916 = smul.addr %s915, 2
      %s917 = smul.addr %s916, 8
      %s918 = scalar_lea.vmem %s8, %s917
      // Predicated region
      $region53: #{improved_net_forward.1} parent=51 // pred_check
        %p919 = pneg %p210
      $region54: #{improved_net_forward.1} parent=51 // pred_check_branch
        %921 = sbr.rel (%p919) target = $region56
      $region55: #{improved_net_forward.1} parent=51 // pred_region
        _
      $region56: #{improved_net_forward.1} parent=51 // pred_fallthru
        _
    $region52: #{improved_net_forward.1} parent=5 // pred_fallthru
      _
    %p922 = scmp.le.s32.totalorder 2, %s14
    // Predicated region
    $region57: #{improved_net_forward.1} parent=5 // pred_check
      %p923 = pneg %p922
    $region58: #{improved_net_forward.1} parent=5 // pred_check_branch
      %925 = sbr.rel (%p923) target = $region60
    $region59: #{improved_net_forward.1} parent=5 // pred_region
      %s926 = ssub.s32 %s14, 2
      // Predicated region
      $region61: #{improved_net_forward.1} parent=59 // pred_check
        %p927 = pneg %p216
      $region62: #{improved_net_forward.1} parent=59 // pred_check_branch
        %929 = sbr.rel (%p927) target = $region64
      $region63: #{improved_net_forward.1} parent=59 // pred_region
        %p930 = scmp.lt.s32.totalorder %s20, 1
        %s931 = scalar_select %p930, %s20, 1
        %s932 = smul.addr %s931, 2
        %s933 = smul.addr %s932, 8
        %s934 = scalar_lea.vmem %s8, %s933
      $region64: #{improved_net_forward.1} parent=59 // pred_fallthru
        _
    $region60: #{improved_net_forward.1} parent=5 // pred_fallthru
      _
  $region6: #{improved_net_forward.1} parent=0 // loop_footer
    %s18 = sadd.s32 1, %s14
  $region7: #{improved_net_forward.1} parent=0 // loop_footer_branch
    %13 = sbr.rel target = $region3
  $region8: #{improved_net_forward.1} parent=0 // loop_exit
    _

</llo_original>
